<compile_context>
chip_gen: v7x
topology: tpu7x:2x2x1
jax: 0.10.0
libtpu: 0.0.40
codegen_flags: <defaults>
</compile_context>

<pallas_src>
import functools

import jax
import jax.numpy as jnp
from jax import lax
from jax.experimental import pallas as pl
from jax.experimental.pallas import tpu as pltpu


# ---------------------------------------------------------------------------
# Fused bottleneck kernel: one image per grid step, layout (C, P=H*W).
# ---------------------------------------------------------------------------
def _bottleneck_kernel(x_ref, w1_ref, w2_ref, w3_ref,
                       s1_ref, b1_ref, s2_ref, b2_ref, s3_ref, b3_ref,
                       o_ref, *, H, W):
    C1 = w1_ref.shape[0]
    P = H * W
    pad = W + 1                                   # enough halo for all 9 taps

    x = x_ref[...]                                # (C0, P) f32, read once

    # ---- stage 1: 1x1 conv + BN + ReLU (bf16 MXU, f32 epilogue) ----------
    y1 = jnp.dot(w1_ref[...], x.astype(jnp.bfloat16),
                 preferred_element_type=jnp.float32)            # (C1, P)
    y1 = jnp.maximum(y1 * s1_ref[...] + b1_ref[...], 0.0)

    # ---- stage 2: 3x3 conv (stride 1, pad 1) as ONE K = 9*C1 matmul -------
    # Zero-extend y1 along the flattened-pixel (lane) axis: the zero columns
    # supply the H padding; W wrap-around is killed by two column masks.
    zpad = jnp.zeros((C1, pad), jnp.float32)
    ypad = jnp.concatenate([zpad, y1, zpad], axis=1)            # (C1, P + 2*pad)

    pos = lax.broadcasted_iota(jnp.int32, (C1, P), 1)           # flattened pixel id
    if W & (W - 1) == 0:
        wcol = pos & (W - 1)                                    # w coordinate
    else:
        wcol = pos % W
    mask_l = wcol >= 1                                          # w-1 in bounds
    mask_r = wcol <= W - 2                                      # w+1 in bounds

    taps = []
    for dy in (-1, 0, 1):
        for dx in (-1, 0, 1):
            off = dy * W + dx
            tap = ypad[:, pad + off: pad + off + P]             # (C1, P) f32
            if dx == -1:
                tap = jnp.where(mask_l, tap, 0.0)               # select, pre-cast
            elif dx == 1:
                tap = jnp.where(mask_r, tap, 0.0)
            taps.append(tap)
    taps = jnp.concatenate(taps, axis=0).astype(jnp.bfloat16)   # (9*C1, P), 1 cast

    y2 = jnp.dot(w2_ref[...], taps, preferred_element_type=jnp.float32)  # (C1, P)
    y2 = jnp.maximum(y2 * s2_ref[...] + b2_ref[...], 0.0)

    # ---- stage 3: 1x1 conv + BN + residual add + ReLU ---------------------
    y3 = jnp.dot(w3_ref[...], y2.astype(jnp.bfloat16),
                 preferred_element_type=jnp.float32)            # (C2, P)
    o_ref[...] = jnp.maximum(y3 * s3_ref[...] + b3_ref[...] + x, 0.0)


# ---------------------------------------------------------------------------
# Wrapper: NCHW in / NCHW out, like the PyTorch module (no HBM transposes).
# ---------------------------------------------------------------------------
def bottleneck_forward(x_nchw, params):
    N, C0, H, W = x_nchw.shape
    C1 = params["w1"].shape[1]          # width
    C2 = params["w3"].shape[1]          # planes * expansion
    assert C2 == C0, "identity add requires inplanes == planes * expansion"
    P = H * W

    # NCHW -> (N, C, H*W): pure reshape (NCHW is already channels-on-sublanes,
    # pixels-on-lanes when flattened), so no transpose round-trip through HBM.
    x = x_nchw.reshape(N, C0, P).astype(jnp.float32)

    # bf16 weights, oriented (Cout, Cin) for (Cout, P) = W @ (Cin, P) matmuls.
    w1t = jnp.transpose(params["w1"]).astype(jnp.bfloat16)               # (C1, C0)
    w2t = jnp.transpose(params["w2"].reshape(9, C1, C1), (2, 0, 1))      # (Cout, 9, Cin)
    w2t = w2t.reshape(C1, 9 * C1).astype(jnp.bfloat16)                   # (C1, 9*C1)
    w3t = jnp.transpose(params["w3"]).astype(jnp.bfloat16)               # (C2, C1)

    # Folded-BN scale/bias as (C, 1): per-channel on sublanes, broadcast on lanes.
    s1 = params["s1"].reshape(C1, 1).astype(jnp.float32)
    b1 = params["b1"].reshape(C1, 1).astype(jnp.float32)
    s2 = params["s2"].reshape(C1, 1).astype(jnp.float32)
    b2 = params["b2"].reshape(C1, 1).astype(jnp.float32)
    s3 = params["s3"].reshape(C2, 1).astype(jnp.float32)
    b3 = params["b3"].reshape(C2, 1).astype(jnp.float32)

    kernel = functools.partial(_bottleneck_kernel, H=H, W=W)

    def full(*shape):
        return pl.BlockSpec(shape, lambda n: (0,) * len(shape))

    out = pl.pallas_call(
        kernel,
        out_shape=jax.ShapeDtypeStruct((N, C2, P), jnp.float32),
        grid=(N,),
        in_specs=[
            pl.BlockSpec((None, C0, P), lambda n: (n, 0, 0)),   # x, lane-dense
            full(C1, C0),                                       # w1^T
            full(C1, 9 * C1),                                   # w2 (im2col-fused)
            full(C2, C1),                                       # w3^T
            full(C1, 1), full(C1, 1),                           # s1, b1
            full(C1, 1), full(C1, 1),                           # s2, b2
            full(C2, 1), full(C2, 1),                           # s3, b3
        ],
        out_specs=pl.BlockSpec((None, C2, P), lambda n: (n, 0, 0)),
        compiler_params=pltpu.CompilerParams(
            dimension_semantics=("parallel",),
        ),
    )(x, w1t, w2t, w3t, s1, b1, s2, b2, s3, b3)

    return out.reshape(N, C2, H, W)


# ---------------------------------------------------------------------------
# Deterministic parameters + pure-JAX reference (mirrors the kernel numerics:
# bf16 MXU inputs, f32 accumulation/epilogue).
# ---------------------------------------------------------------------------
def make_params(key, inplanes, planes, base_width=64, groups=1, expansion=4, eps=1e-5):
    width = int(planes * (base_width / 64.0)) * groups
    cout3 = planes * expansion
    ks = jax.random.split(key, 12)

    def bn_fold(kg, kb, km, kv, c):
        gamma = jax.random.uniform(kg, (c,), jnp.float32, 0.5, 1.5)
        beta = 0.1 * jax.random.normal(kb, (c,), jnp.float32)
        rmean = 0.1 * jax.random.normal(km, (c,), jnp.float32)
        rvar = jax.random.uniform(kv, (c,), jnp.float32, 0.5, 1.5)
        scale = gamma / jnp.sqrt(rvar + eps)
        bias = beta - rmean * scale
        return scale, bias

    w1 = 0.1 * jax.random.normal(ks[0], (inplanes, width), jnp.float32)      # (Cin, Cout)
    w2 = 0.1 * jax.random.normal(ks[1], (3, 3, width, width), jnp.float32)   # (kh, kw, Cin, Cout)
    w3 = 0.1 * jax.random.normal(ks[2], (width, cout3), jnp.float32)
    s1, b1 = bn_fold(ks[3], ks[4], ks[5], ks[6], width)
    s2, b2 = bn_fold(ks[7], ks[8], ks[9], ks[10], width)
    kk = jax.random.split(ks[11], 4)
    s3, b3 = bn_fold(kk[0], kk[1], kk[2], kk[3], cout3)
    return dict(w1=w1, w2=w2, w3=w3, s1=s1, b1=b1, s2=s2, b2=b2, s3=s3, b3=b3)


def bottleneck_reference(x_nchw, params):
    def bn(y, s, b):
        return y * s.reshape(1, -1, 1, 1) + b.reshape(1, -1, 1, 1)

    def conv(y, w_oihw, pad):
        return lax.conv_general_dilated(
            y.astype(jnp.bfloat16), w_oihw.astype(jnp.bfloat16),
            window_strides=(1, 1), padding=[(pad, pad), (pad, pad)],
            dimension_numbers=("NCHW", "OIHW", "NCHW"),
            preferred_element_type=jnp.float32)

    w1 = params["w1"].T[:, :, None, None]                     # (Cout, Cin, 1, 1)
    w2 = jnp.transpose(params["w2"], (3, 2, 0, 1))            # (Cout, Cin, 3, 3)
    w3 = params["w3"].T[:, :, None, None]

    out = jax.nn.relu(bn(conv(x_nchw, w1, 0), params["s1"], params["b1"]))
    out = jax.nn.relu(bn(conv(out, w2, 1), params["s2"], params["b2"]))
    out = bn(conv(out, w3, 0), params["s3"], params["b3"]) + x_nchw
    return jax.nn.relu(out)


if __name__ == "__main__":
    # Shapes consistent with the module: planes=8, expansion=4 => inplanes=32
    # (identity path requires inplanes == planes*expansion when downsample=None).
    N, planes, H, W = 2, 8, 16, 16
    inplanes = planes * 4

    key = jax.random.PRNGKey(0)
    kx, kp = jax.random.split(key)
    x = jax.random.normal(kx, (N, inplanes, H, W), jnp.float32)
    params = make_params(kp, inplanes, planes)

    out = jax.block_until_ready(jax.jit(bottleneck_forward)(x, params))
    ref = jax.block_until_ready(jax.jit(bottleneck_reference)(x, params))

    assert out.shape == (N, inplanes, H, W)
    max_err = float(jnp.max(jnp.abs(out - ref)))
    assert jnp.allclose(out, ref, rtol=1e-2, atol=1e-2), max_err
    print("KERNEL_OK")
</pallas_src>

<mosaic_0001>
module attributes {stable_mosaic.version = 11 : i64} {
  func.func @_bottleneck_kernel(%arg0: i32, %arg1: memref<1x32x256xf32, #tpu.memory_space<vmem>>, %arg2: memref<8x32xbf16, #tpu.memory_space<vmem>>, %arg3: memref<8x72xbf16, #tpu.memory_space<vmem>>, %arg4: memref<32x8xbf16, #tpu.memory_space<vmem>>, %arg5: memref<8x1xf32, #tpu.memory_space<vmem>>, %arg6: memref<8x1xf32, #tpu.memory_space<vmem>>, %arg7: memref<8x1xf32, #tpu.memory_space<vmem>>, %arg8: memref<8x1xf32, #tpu.memory_space<vmem>>, %arg9: memref<32x1xf32, #tpu.memory_space<vmem>>, %arg10: memref<32x1xf32, #tpu.memory_space<vmem>>, %arg11: memref<1x32x256xf32, #tpu.memory_space<vmem>>) attributes {dimension_semantics = [#tpu.dimension_semantics<parallel>], iteration_bounds = array<i64: 2>, scalar_prefetch = 0 : i64, scratch_operands = 0 : i64, tpu.core_type = #tpu.core_type<tc>, window_params = [{transform_indices = @transform_0, window_bounds = array<i64: 1, 32, 256>}, {pipeline_mode = #tpu.pipeline_mode<synchronous>, transform_indices = @transform_1, window_bounds = array<i64: 8, 32>}, {pipeline_mode = #tpu.pipeline_mode<synchronous>, transform_indices = @transform_2, window_bounds = array<i64: 8, 72>}, {pipeline_mode = #tpu.pipeline_mode<synchronous>, transform_indices = @transform_3, window_bounds = array<i64: 32, 8>}, {pipeline_mode = #tpu.pipeline_mode<synchronous>, transform_indices = @transform_4, window_bounds = array<i64: 8, 1>}, {pipeline_mode = #tpu.pipeline_mode<synchronous>, transform_indices = @transform_5, window_bounds = array<i64: 8, 1>}, {pipeline_mode = #tpu.pipeline_mode<synchronous>, transform_indices = @transform_6, window_bounds = array<i64: 8, 1>}, {pipeline_mode = #tpu.pipeline_mode<synchronous>, transform_indices = @transform_7, window_bounds = array<i64: 8, 1>}, {pipeline_mode = #tpu.pipeline_mode<synchronous>, transform_indices = @transform_8, window_bounds = array<i64: 32, 1>}, {pipeline_mode = #tpu.pipeline_mode<synchronous>, transform_indices = @transform_9, window_bounds = array<i64: 32, 1>}, {transform_indices = @transform_10, window_bounds = array<i64: 1, 32, 256>}]} {
    %c0 = arith.constant 0 : index
    %c0_0 = arith.constant 0 : index
    %c0_1 = arith.constant 0 : index
    %0 = vector.load %arg1[%c0, %c0_0, %c0_1] : memref<1x32x256xf32, #tpu.memory_space<vmem>>, vector<1x32x256xf32>
    %1 = vector.shape_cast %0 : vector<1x32x256xf32> to vector<32x256xf32>
    %c0_2 = arith.constant 0 : index
    %c0_3 = arith.constant 0 : index
    %2 = vector.load %arg2[%c0_2, %c0_3] : memref<8x32xbf16, #tpu.memory_space<vmem>>, vector<8x32xbf16>
    %3 = arith.truncf %1 : vector<32x256xf32> to vector<32x256xbf16>
    %cst = arith.constant dense<0.000000e+00> : vector<8x256xf32>
    %4 = tpu.matmul %2, %3, %cst {dimension_numbers = #tpu.dot_dimension_numbers<[1], [0], [0], [1], [0, 0, 1, 1], [], []>} : vector<8x32xbf16>, vector<32x256xbf16>, vector<8x256xf32> -> vector<8x256xf32>
    %c0_4 = arith.constant 0 : index
    %c0_5 = arith.constant 0 : index
    %5 = vector.load %arg5[%c0_4, %c0_5] : memref<8x1xf32, #tpu.memory_space<vmem>>, vector<8x1xf32>
    %6 = vector.broadcast %5 : vector<8x1xf32> to vector<8x256xf32>
    %7 = arith.mulf %4, %6 : vector<8x256xf32>
    %c0_6 = arith.constant 0 : index
    %c0_7 = arith.constant 0 : index
    %8 = vector.load %arg6[%c0_6, %c0_7] : memref<8x1xf32, #tpu.memory_space<vmem>>, vector<8x1xf32>
    %9 = vector.broadcast %8 : vector<8x1xf32> to vector<8x256xf32>
    %10 = arith.addf %7, %9 : vector<8x256xf32>
    %cst_8 = arith.constant 0.000000e+00 : f32
    %11 = vector.broadcast %cst_8 : f32 to vector<8x256xf32>
    %12 = arith.maximumf %10, %11 : vector<8x256xf32>
    %cst_9 = arith.constant 0.000000e+00 : f32
    %13 = vector.broadcast %cst_9 : f32 to vector<8x17xf32>
    %14 = tpu.concatenate %13, %12, %13 in 1 : vector<8x17xf32>, vector<8x256xf32>, vector<8x17xf32> -> vector<8x290xf32>
    %15 = tpu.iota {dimensions = array<i32: 1>} : vector<8x256xi32>
    %c15_i32 = arith.constant 15 : i32
    %16 = vector.broadcast %c15_i32 : i32 to vector<8x256xi32>
    %17 = arith.andi %15, %16 : vector<8x256xi32>
    %c1_i32 = arith.constant 1 : i32
    %18 = vector.broadcast %c1_i32 : i32 to vector<8x256xi32>
    %19 = arith.cmpi sge, %17, %18 : vector<8x256xi32>
    %c14_i32 = arith.constant 14 : i32
    %20 = vector.broadcast %c14_i32 : i32 to vector<8x256xi32>
    %21 = arith.cmpi sle, %17, %20 : vector<8x256xi32>
    %22 = vector.extract_strided_slice %14 {offsets = [0, 0], sizes = [8, 256], strides = [1, 1]} : vector<8x290xf32> to vector<8x256xf32>
    %cst_10 = arith.constant 0.000000e+00 : f32
    %23 = vector.broadcast %cst_10 : f32 to vector<8x256xf32>
    %24 = arith.select %19, %22, %23 : vector<8x256xi1>, vector<8x256xf32>
    %25 = vector.extract_strided_slice %14 {offsets = [0, 1], sizes = [8, 256], strides = [1, 1]} : vector<8x290xf32> to vector<8x256xf32>
    %26 = vector.extract_strided_slice %14 {offsets = [0, 2], sizes = [8, 256], strides = [1, 1]} : vector<8x290xf32> to vector<8x256xf32>
    %cst_11 = arith.constant 0.000000e+00 : f32
    %27 = vector.broadcast %cst_11 : f32 to vector<8x256xf32>
    %28 = arith.select %21, %26, %27 : vector<8x256xi1>, vector<8x256xf32>
    %29 = vector.extract_strided_slice %14 {offsets = [0, 16], sizes = [8, 256], strides = [1, 1]} : vector<8x290xf32> to vector<8x256xf32>
    %cst_12 = arith.constant 0.000000e+00 : f32
    %30 = vector.broadcast %cst_12 : f32 to vector<8x256xf32>
    %31 = arith.select %19, %29, %30 : vector<8x256xi1>, vector<8x256xf32>
    %32 = vector.extract_strided_slice %14 {offsets = [0, 17], sizes = [8, 256], strides = [1, 1]} : vector<8x290xf32> to vector<8x256xf32>
    %33 = vector.extract_strided_slice %14 {offsets = [0, 18], sizes = [8, 256], strides = [1, 1]} : vector<8x290xf32> to vector<8x256xf32>
    %cst_13 = arith.constant 0.000000e+00 : f32
    %34 = vector.broadcast %cst_13 : f32 to vector<8x256xf32>
    %35 = arith.select %21, %33, %34 : vector<8x256xi1>, vector<8x256xf32>
    %36 = vector.extract_strided_slice %14 {offsets = [0, 32], sizes = [8, 256], strides = [1, 1]} : vector<8x290xf32> to vector<8x256xf32>
    %cst_14 = arith.constant 0.000000e+00 : f32
    %37 = vector.broadcast %cst_14 : f32 to vector<8x256xf32>
    %38 = arith.select %19, %36, %37 : vector<8x256xi1>, vector<8x256xf32>
    %39 = vector.extract_strided_slice %14 {offsets = [0, 33], sizes = [8, 256], strides = [1, 1]} : vector<8x290xf32> to vector<8x256xf32>
    %40 = vector.extract_strided_slice %14 {offsets = [0, 34], sizes = [8, 256], strides = [1, 1]} : vector<8x290xf32> to vector<8x256xf32>
    %cst_15 = arith.constant 0.000000e+00 : f32
    %41 = vector.broadcast %cst_15 : f32 to vector<8x256xf32>
    %42 = arith.select %21, %40, %41 : vector<8x256xi1>, vector<8x256xf32>
    %43 = tpu.concatenate %24, %25, %28, %31, %32, %35, %38, %39, %42 in 0 : vector<8x256xf32>, vector<8x256xf32>, vector<8x256xf32>, vector<8x256xf32>, vector<8x256xf32>, vector<8x256xf32>, vector<8x256xf32>, vector<8x256xf32>, vector<8x256xf32> -> vector<72x256xf32>
    %44 = arith.truncf %43 : vector<72x256xf32> to vector<72x256xbf16>
    %c0_16 = arith.constant 0 : index
    %c0_17 = arith.constant 0 : index
    %45 = vector.load %arg3[%c0_16, %c0_17] : memref<8x72xbf16, #tpu.memory_space<vmem>>, vector<8x72xbf16>
    %cst_18 = arith.constant dense<0.000000e+00> : vector<8x256xf32>
    %46 = tpu.matmul %45, %44, %cst_18 {dimension_numbers = #tpu.dot_dimension_numbers<[1], [0], [0], [1], [0, 0, 1, 1], [], []>} : vector<8x72xbf16>, vector<72x256xbf16>, vector<8x256xf32> -> vector<8x256xf32>
    %c0_19 = arith.constant 0 : index
    %c0_20 = arith.constant 0 : index
    %47 = vector.load %arg7[%c0_19, %c0_20] : memref<8x1xf32, #tpu.memory_space<vmem>>, vector<8x1xf32>
    %48 = vector.broadcast %47 : vector<8x1xf32> to vector<8x256xf32>
    %49 = arith.mulf %46, %48 : vector<8x256xf32>
    %c0_21 = arith.constant 0 : index
    %c0_22 = arith.constant 0 : index
    %50 = vector.load %arg8[%c0_21, %c0_22] : memref<8x1xf32, #tpu.memory_space<vmem>>, vector<8x1xf32>
    %51 = vector.broadcast %50 : vector<8x1xf32> to vector<8x256xf32>
    %52 = arith.addf %49, %51 : vector<8x256xf32>
    %cst_23 = arith.constant 0.000000e+00 : f32
    %53 = vector.broadcast %cst_23 : f32 to vector<8x256xf32>
    %54 = arith.maximumf %52, %53 : vector<8x256xf32>
    %c0_24 = arith.constant 0 : index
    %c0_25 = arith.constant 0 : index
    %55 = vector.load %arg4[%c0_24, %c0_25] : memref<32x8xbf16, #tpu.memory_space<vmem>>, vector<32x8xbf16>
    %56 = arith.truncf %54 : vector<8x256xf32> to vector<8x256xbf16>
    %cst_26 = arith.constant dense<0.000000e+00> : vector<32x256xf32>
    %57 = tpu.matmul %55, %56, %cst_26 {dimension_numbers = #tpu.dot_dimension_numbers<[1], [0], [0], [1], [0, 0, 1, 1], [], []>} : vector<32x8xbf16>, vector<8x256xbf16>, vector<32x256xf32> -> vector<32x256xf32>
    %c0_27 = arith.constant 0 : index
    %c0_28 = arith.constant 0 : index
    %58 = vector.load %arg9[%c0_27, %c0_28] : memref<32x1xf32, #tpu.memory_space<vmem>>, vector<32x1xf32>
    %59 = vector.broadcast %58 : vector<32x1xf32> to vector<32x256xf32>
    %60 = arith.mulf %57, %59 : vector<32x256xf32>
    %c0_29 = arith.constant 0 : index
    %c0_30 = arith.constant 0 : index
    %61 = vector.load %arg10[%c0_29, %c0_30] : memref<32x1xf32, #tpu.memory_space<vmem>>, vector<32x1xf32>
    %62 = vector.broadcast %61 : vector<32x1xf32> to vector<32x256xf32>
    %63 = arith.addf %60, %62 : vector<32x256xf32>
    %64 = arith.addf %63, %1 : vector<32x256xf32>
    %cst_31 = arith.constant 0.000000e+00 : f32
    %65 = vector.broadcast %cst_31 : f32 to vector<32x256xf32>
    %66 = arith.maximumf %64, %65 : vector<32x256xf32>
    %c0_32 = arith.constant 0 : index
    %c0_33 = arith.constant 0 : index
    %c0_34 = arith.constant 0 : index
    %67 = vector.load %arg11[%c0_32, %c0_33, %c0_34] : memref<1x32x256xf32, #tpu.memory_space<vmem>>, vector<1x32x256xf32>
    %68 = vector.shape_cast %67 : vector<1x32x256xf32> to vector<32x256xf32>
    %69 = vector.shape_cast %66 : vector<32x256xf32> to vector<1x32x256xf32>
    tpu.vector_store %arg11[%c0_32, %c0_33, %c0_34], %69 {strides = array<i32>} : memref<1x32x256xf32, #tpu.memory_space<vmem>>, vector<1x32x256xf32>,
    return
  }
  func.func @transform_0(%arg0: i32) -> (i32, i32, i32) {
    %c0_i32 = arith.constant 0 : i32
    %c0_i32_0 = arith.constant 0 : i32
    %c0_i32_1 = arith.constant 0 : i32
    return %arg0, %c0_i32, %c0_i32_0 : i32, i32, i32
  }
  func.func @transform_1(%arg0: i32) -> (i32, i32) {
    %c0_i32 = arith.constant 0 : i32
    %c0_i32_0 = arith.constant 0 : i32
    %c0_i32_1 = arith.constant 0 : i32
    return %c0_i32, %c0_i32_0 : i32, i32
  }
  func.func @transform_2(%arg0: i32) -> (i32, i32) {
    %c0_i32 = arith.constant 0 : i32
    %c0_i32_0 = arith.constant 0 : i32
    %c0_i32_1 = arith.constant 0 : i32
    return %c0_i32, %c0_i32_0 : i32, i32
  }
  func.func @transform_3(%arg0: i32) -> (i32, i32) {
    %c0_i32 = arith.constant 0 : i32
    %c0_i32_0 = arith.constant 0 : i32
    %c0_i32_1 = arith.constant 0 : i32
    return %c0_i32, %c0_i32_0 : i32, i32
  }
  func.func @transform_4(%arg0: i32) -> (i32, i32) {
    %c0_i32 = arith.constant 0 : i32
    %c0_i32_0 = arith.constant 0 : i32
    %c0_i32_1 = arith.constant 0 : i32
    return %c0_i32, %c0_i32_0 : i32, i32
  }
  func.func @transform_5(%arg0: i32) -> (i32, i32) {
    %c0_i32 = arith.constant 0 : i32
    %c0_i32_0 = arith.constant 0 : i32
    %c0_i32_1 = arith.constant 0 : i32
    return %c0_i32, %c0_i32_0 : i32, i32
  }
  func.func @transform_6(%arg0: i32) -> (i32, i32) {
    %c0_i32 = arith.constant 0 : i32
    %c0_i32_0 = arith.constant 0 : i32
    %c0_i32_1 = arith.constant 0 : i32
    return %c0_i32, %c0_i32_0 : i32, i32
  }
  func.func @transform_7(%arg0: i32) -> (i32, i32) {
    %c0_i32 = arith.constant 0 : i32
    %c0_i32_0 = arith.constant 0 : i32
    %c0_i32_1 = arith.constant 0 : i32
    return %c0_i32, %c0_i32_0 : i32, i32
  }
  func.func @transform_8(%arg0: i32) -> (i32, i32) {
    %c0_i32 = arith.constant 0 : i32
    %c0_i32_0 = arith.constant 0 : i32
    %c0_i32_1 = arith.constant 0 : i32
    return %c0_i32, %c0_i32_0 : i32, i32
  }
  func.func @transform_9(%arg0: i32) -> (i32, i32) {
    %c0_i32 = arith.constant 0 : i32
    %c0_i32_0 = arith.constant 0 : i32
    %c0_i32_1 = arith.constant 0 : i32
    return %c0_i32, %c0_i32_0 : i32, i32
  }
  func.func @transform_10(%arg0: i32) -> (i32, i32, i32) {
    %c0_i32 = arith.constant 0 : i32
    %c0_i32_0 = arith.constant 0 : i32
    %c0_i32_1 = arith.constant 0 : i32
    return %arg0, %c0_i32, %c0_i32_0 : i32, i32, i32
  }
}

</mosaic_0001>

<llo_original>
// kernel: bottleneck_forward.1
$region0: #{bottleneck_forward.1}
  #allocation0 [shape = 'u32[]', space=smem, size = 0x4, offset = 0x4, fixed_abs, tag = 'smem constant byte address 0x4 - core index']
  #allocation1 [shape = 'u32[144,128]{1,0:T(1,128)}', space=vmem, size = 0x12000, scoped, tag = 'internal scratch']
  %s0 = inlined_call_operand.vmem [shape: f32[2,32,256], index: 0, kind: input, shape index: {}]
  %s1 = inlined_call_operand.vmem [shape: bf16[8,32], index: 1, kind: input, shape index: {}]
  %s2 = inlined_call_operand.vmem [shape: bf16[8,72], index: 2, kind: input, shape index: {}]
  %s3 = inlined_call_operand.vmem [shape: bf16[32,8], index: 3, kind: input, shape index: {}]
  %s4 = inlined_call_operand.vmem [shape: f32[8,1], index: 4, kind: input, shape index: {}]
  %s5 = inlined_call_operand.vmem [shape: f32[8,1], index: 5, kind: input, shape index: {}]
  %s6 = inlined_call_operand.vmem [shape: f32[8,1], index: 6, kind: input, shape index: {}]
  %s7 = inlined_call_operand.vmem [shape: f32[8,1], index: 7, kind: input, shape index: {}]
  %s8 = inlined_call_operand.vmem [shape: f32[32,1], index: 8, kind: input, shape index: {}]
  %s9 = inlined_call_operand.vmem [shape: f32[32,1], index: 9, kind: input, shape index: {}]
  %s10 = inlined_call_operand.vmem [shape: f32[2,32,256], index: 10, kind: output, shape index: {}]
  %s11 = sld [smem:[#allocation0]]
  $region73: #{bottleneck_forward.1} parent=0
    _
  %s13 = ssub.s32 1, %s11
  %s14 = scalar_select 0, %s13, %s11
  loop: start=0, step=1, limit=4
  $region2: #{bottleneck_forward.1} parent=0 // loop_pre_header
    _
  $region3: #{bottleneck_forward.1} parent=0 // loop_header
    %s16 = sphi 0, %s20
    %p17 = scmp.ge.s32.totalorder %s16, 4
    %s26 = sphi 0, %s28
    %s29 = sphi 0, %s26
    %s30 = sphi 0, %s29
    %s46 = sphi 0, %s30
    %s50 = sphi 0, %s50
    %s52 = sphi 0, %s50
    %s53 = sphi 0, %s52
    %s67 = sphi 0, %s53
    %s71 = sphi 0, %s71
    %s73 = sphi 0, %s71
    %s74 = sphi 0, %s73
    %s88 = sphi 0, %s74
    %s92 = sphi 0, %s92
    %s94 = sphi 0, %s92
    %s95 = sphi 0, %s94
    %s109 = sphi 0, %s95
    %s113 = sphi 0, %s113
    %s115 = sphi 0, %s113
    %s116 = sphi 0, %s115
    %s130 = sphi 0, %s116
    %s134 = sphi 0, %s134
    %s136 = sphi 0, %s134
    %s137 = sphi 0, %s136
    %s151 = sphi 0, %s137
    %s155 = sphi 0, %s155
    %s157 = sphi 0, %s155
    %s158 = sphi 0, %s157
    %s172 = sphi 0, %s158
    %s176 = sphi 0, %s176
    %s178 = sphi 0, %s176
    %s179 = sphi 0, %s178
    %s193 = sphi 0, %s179
    %s197 = sphi 0, %s197
    %s199 = sphi 0, %s197
    %s200 = sphi 0, %s199
    %s214 = sphi 0, %s200
    %s218 = sphi 0, %s218
    %s220 = sphi 0, %s218
    %s221 = sphi 0, %s220
    %s235 = sphi 0, %s221
    %s241 = sphi 0, %s243
    %s244 = sphi 0, %s241
    %s245 = sphi 0, %s244
    %s261 = sphi 0, %s245
  $region4: #{bottleneck_forward.1} parent=0 // loop_header_branch
    %19 = sbr.rel (%p17) target = $region8
  $region5: #{bottleneck_forward.1} parent=0 // loop_body
    %s21 = ssub.s32 %s16, 1
    %s22 = ssub.s32 %s16, 2
    %s23 = sadd.s32 %s16, 1
    %s24 = ssub.s32 %s16, %s23
    %p25 = scmp.eq.s32.totalorder %s24, 0
    %s27 = sadd.s32 %s26, 1
    %s28 = scalar_select %p25, %s26, %s27
    %p31 = pneg %p25
    %p32 = scmp.eq.s32.totalorder %s16, 1
    %p33 = por %p31, %p32
    %p34 = scmp.ne.s32.totalorder %s26, %s29
    %p35 = scmp.eq.s32.totalorder %s16, 0
    %p36 = por %p34, %p35
    %p37 = scmp.ne.s32.totalorder %s26, %s29
    %p38 = scmp.eq.s32.totalorder %s21, 1
    %p39 = por %p37, %p38
    %p40 = scmp.ne.s32.totalorder %s29, %s30
    %p41 = scmp.eq.s32.totalorder %s21, 0
    %p42 = por %p40, %p41
    %p43 = scmp.ne.s32.totalorder %s29, %s30
    %p44 = scmp.eq.s32.totalorder %s22, 1
    %p45 = por %p43, %p44
    %p47 = scmp.ne.s32.totalorder %s30, %s46
    %p48 = scmp.eq.s32.totalorder %s22, 0
    %p49 = por %p47, %p48
    %s51 = sadd.s32 %s50, 1
    %p54 = scmp.eq.s32.totalorder %s16, 1
    %p55 = scmp.ne.s32.totalorder %s50, %s52
    %p56 = scmp.eq.s32.totalorder %s16, 0
    %p57 = por %p55, %p56
    %p58 = scmp.ne.s32.totalorder %s50, %s52
    %p59 = scmp.eq.s32.totalorder %s21, 1
    %p60 = por %p58, %p59
    %p61 = scmp.ne.s32.totalorder %s52, %s53
    %p62 = scmp.eq.s32.totalorder %s21, 0
    %p63 = por %p61, %p62
    %p64 = scmp.ne.s32.totalorder %s52, %s53
    %p65 = scmp.eq.s32.totalorder %s22, 1
    %p66 = por %p64, %p65
    %p68 = scmp.ne.s32.totalorder %s53, %s67
    %p69 = scmp.eq.s32.totalorder %s22, 0
    %p70 = por %p68, %p69
    %s72 = sadd.s32 %s71, 1
    %p75 = scmp.eq.s32.totalorder %s16, 1
    %p76 = scmp.ne.s32.totalorder %s71, %s73
    %p77 = scmp.eq.s32.totalorder %s16, 0
    %p78 = por %p76, %p77
    %p79 = scmp.ne.s32.totalorder %s71, %s73
    %p80 = scmp.eq.s32.totalorder %s21, 1
    %p81 = por %p79, %p80
    %p82 = scmp.ne.s32.totalorder %s73, %s74
    %p83 = scmp.eq.s32.totalorder %s21, 0
    %p84 = por %p82, %p83
    %p85 = scmp.ne.s32.totalorder %s73, %s74
    %p86 = scmp.eq.s32.totalorder %s22, 1
    %p87 = por %p85, %p86
    %p89 = scmp.ne.s32.totalorder %s74, %s88
    %p90 = scmp.eq.s32.totalorder %s22, 0
    %p91 = por %p89, %p90
    %s93 = sadd.s32 %s92, 1
    %p96 = scmp.eq.s32.totalorder %s16, 1
    %p97 = scmp.ne.s32.totalorder %s92, %s94
    %p98 = scmp.eq.s32.totalorder %s16, 0
    %p99 = por %p97, %p98
    %p100 = scmp.ne.s32.totalorder %s92, %s94
    %p101 = scmp.eq.s32.totalorder %s21, 1
    %p102 = por %p100, %p101
    %p103 = scmp.ne.s32.totalorder %s94, %s95
    %p104 = scmp.eq.s32.totalorder %s21, 0
    %p105 = por %p103, %p104
    %p106 = scmp.ne.s32.totalorder %s94, %s95
    %p107 = scmp.eq.s32.totalorder %s22, 1
    %p108 = por %p106, %p107
    %p110 = scmp.ne.s32.totalorder %s95, %s109
    %p111 = scmp.eq.s32.totalorder %s22, 0
    %p112 = por %p110, %p111
    %s114 = sadd.s32 %s113, 1
    %p117 = scmp.eq.s32.totalorder %s16, 1
    %p118 = scmp.ne.s32.totalorder %s113, %s115
    %p119 = scmp.eq.s32.totalorder %s16, 0
    %p120 = por %p118, %p119
    %p121 = scmp.ne.s32.totalorder %s113, %s115
    %p122 = scmp.eq.s32.totalorder %s21, 1
    %p123 = por %p121, %p122
    %p124 = scmp.ne.s32.totalorder %s115, %s116
    %p125 = scmp.eq.s32.totalorder %s21, 0
    %p126 = por %p124, %p125
    %p127 = scmp.ne.s32.totalorder %s115, %s116
    %p128 = scmp.eq.s32.totalorder %s22, 1
    %p129 = por %p127, %p128
    %p131 = scmp.ne.s32.totalorder %s116, %s130
    %p132 = scmp.eq.s32.totalorder %s22, 0
    %p133 = por %p131, %p132
    %s135 = sadd.s32 %s134, 1
    %p138 = scmp.eq.s32.totalorder %s16, 1
    %p139 = scmp.ne.s32.totalorder %s134, %s136
    %p140 = scmp.eq.s32.totalorder %s16, 0
    %p141 = por %p139, %p140
    %p142 = scmp.ne.s32.totalorder %s134, %s136
    %p143 = scmp.eq.s32.totalorder %s21, 1
    %p144 = por %p142, %p143
    %p145 = scmp.ne.s32.totalorder %s136, %s137
    %p146 = scmp.eq.s32.totalorder %s21, 0
    %p147 = por %p145, %p146
    %p148 = scmp.ne.s32.totalorder %s136, %s137
    %p149 = scmp.eq.s32.totalorder %s22, 1
    %p150 = por %p148, %p149
    %p152 = scmp.ne.s32.totalorder %s137, %s151
    %p153 = scmp.eq.s32.totalorder %s22, 0
    %p154 = por %p152, %p153
    %s156 = sadd.s32 %s155, 1
    %p159 = scmp.eq.s32.totalorder %s16, 1
    %p160 = scmp.ne.s32.totalorder %s155, %s157
    %p161 = scmp.eq.s32.totalorder %s16, 0
    %p162 = por %p160, %p161
    %p163 = scmp.ne.s32.totalorder %s155, %s157
    %p164 = scmp.eq.s32.totalorder %s21, 1
    %p165 = por %p163, %p164
    %p166 = scmp.ne.s32.totalorder %s157, %s158
    %p167 = scmp.eq.s32.totalorder %s21, 0
    %p168 = por %p166, %p167
    %p169 = scmp.ne.s32.totalorder %s157, %s158
    %p170 = scmp.eq.s32.totalorder %s22, 1
    %p171 = por %p169, %p170
    %p173 = scmp.ne.s32.totalorder %s158, %s172
    %p174 = scmp.eq.s32.totalorder %s22, 0
    %p175 = por %p173, %p174
    %s177 = sadd.s32 %s176, 1
    %p180 = scmp.eq.s32.totalorder %s16, 1
    %p181 = scmp.ne.s32.totalorder %s176, %s178
    %p182 = scmp.eq.s32.totalorder %s16, 0
    %p183 = por %p181, %p182
    %p184 = scmp.ne.s32.totalorder %s176, %s178
    %p185 = scmp.eq.s32.totalorder %s21, 1
    %p186 = por %p184, %p185
    %p187 = scmp.ne.s32.totalorder %s178, %s179
    %p188 = scmp.eq.s32.totalorder %s21, 0
    %p189 = por %p187, %p188
    %p190 = scmp.ne.s32.totalorder %s178, %s179
    %p191 = scmp.eq.s32.totalorder %s22, 1
    %p192 = por %p190, %p191
    %p194 = scmp.ne.s32.totalorder %s179, %s193
    %p195 = scmp.eq.s32.totalorder %s22, 0
    %p196 = por %p194, %p195
    %s198 = sadd.s32 %s197, 1
    %p201 = scmp.eq.s32.totalorder %s16, 1
    %p202 = scmp.ne.s32.totalorder %s197, %s199
    %p203 = scmp.eq.s32.totalorder %s16, 0
    %p204 = por %p202, %p203
    %p205 = scmp.ne.s32.totalorder %s197, %s199
    %p206 = scmp.eq.s32.totalorder %s21, 1
    %p207 = por %p205, %p206
    %p208 = scmp.ne.s32.totalorder %s199, %s200
    %p209 = scmp.eq.s32.totalorder %s21, 0
    %p210 = por %p208, %p209
    %p211 = scmp.ne.s32.totalorder %s199, %s200
    %p212 = scmp.eq.s32.totalorder %s22, 1
    %p213 = por %p211, %p212
    %p215 = scmp.ne.s32.totalorder %s200, %s214
    %p216 = scmp.eq.s32.totalorder %s22, 0
    %p217 = por %p215, %p216
    %s219 = sadd.s32 %s218, 1
    %p222 = scmp.eq.s32.totalorder %s16, 1
    %p223 = scmp.ne.s32.totalorder %s218, %s220
    %p224 = scmp.eq.s32.totalorder %s16, 0
    %p225 = por %p223, %p224
    %p226 = scmp.ne.s32.totalorder %s218, %s220
    %p227 = scmp.eq.s32.totalorder %s21, 1
    %p228 = por %p226, %p227
    %p229 = scmp.ne.s32.totalorder %s220, %s221
    %p230 = scmp.eq.s32.totalorder %s21, 0
    %p231 = por %p229, %p230
    %p232 = scmp.ne.s32.totalorder %s220, %s221
    %p233 = scmp.eq.s32.totalorder %s22, 1
    %p234 = por %p232, %p233
    %p236 = scmp.ne.s32.totalorder %s221, %s235
    %p237 = scmp.eq.s32.totalorder %s22, 0
    %p238 = por %p236, %p237
    %s239 = ssub.s32 %s16, %s23
    %p240 = scmp.eq.s32.totalorder %s239, 0
    %s242 = sadd.s32 %s241, 1
    %s243 = scalar_select %p240, %s241, %s242
    %p246 = pneg %p240
    %p247 = scmp.eq.s32.totalorder %s16, 1
    %p248 = por %p246, %p247
    %p249 = scmp.ne.s32.totalorder %s241, %s244
    %p250 = scmp.eq.s32.totalorder %s16, 0
    %p251 = por %p249, %p250
    %p252 = scmp.ne.s32.totalorder %s241, %s244
    %p253 = scmp.eq.s32.totalorder %s21, 1
    %p254 = por %p252, %p253
    %p255 = scmp.ne.s32.totalorder %s244, %s245
    %p256 = scmp.eq.s32.totalorder %s21, 0
    %p257 = por %p255, %p256
    %p258 = scmp.ne.s32.totalorder %s244, %s245
    %p259 = scmp.eq.s32.totalorder %s22, 1
    %p260 = por %p258, %p259
    %p262 = scmp.ne.s32.totalorder %s245, %s261
    %p263 = scmp.eq.s32.totalorder %s22, 0
    %p264 = por %p262, %p263
    %p265 = scmp.le.s32.totalorder 1, %s16
    %p266 = scmp.lt.s32.totalorder %s16, 3
    %p267 = pnand %p265, %p266
    %p268 = pneg %p267
    // Predicated region
    $region9: #{bottleneck_forward.1} parent=5 // pred_check
      _
    $region10: #{bottleneck_forward.1} parent=5 // pred_check_branch
      %270 = sbr.rel (%p267) target = $region12
    $region11: #{bottleneck_forward.1} parent=5 // pred_region
      %s271 = ssub.s32 %s16, 1
      // Predicated region
      $region13: #{bottleneck_forward.1} parent=11 // pred_check
        %p272 = pneg %p63
      $region14: #{bottleneck_forward.1} parent=11 // pred_check_branch
        %274 = sbr.rel (%p272) target = $region16
      $region15: #{bottleneck_forward.1} parent=11 // pred_region
        _
      $region16: #{bottleneck_forward.1} parent=11 // pred_fallthru
        _
      // Predicated region
      $region17: #{bottleneck_forward.1} parent=11 // pred_check
        %p275 = pneg %p84
      $region18: #{bottleneck_forward.1} parent=11 // pred_check_branch
        %277 = sbr.rel (%p275) target = $region20
      $region19: #{bottleneck_forward.1} parent=11 // pred_region
        _
      $region20: #{bottleneck_forward.1} parent=11 // pred_fallthru
        _
      // Predicated region
      $region21: #{bottleneck_forward.1} parent=11 // pred_check
        %p278 = pneg %p105
      $region22: #{bottleneck_forward.1} parent=11 // pred_check_branch
        %280 = sbr.rel (%p278) target = $region24
      $region23: #{bottleneck_forward.1} parent=11 // pred_region
        _
      $region24: #{bottleneck_forward.1} parent=11 // pred_fallthru
        _
      // Predicated region
      $region25: #{bottleneck_forward.1} parent=11 // pred_check
        %p281 = pneg %p126
      $region26: #{bottleneck_forward.1} parent=11 // pred_check_branch
        %283 = sbr.rel (%p281) target = $region28
      $region27: #{bottleneck_forward.1} parent=11 // pred_region
        _
      $region28: #{bottleneck_forward.1} parent=11 // pred_fallthru
        _
      // Predicated region
      $region29: #{bottleneck_forward.1} parent=11 // pred_check
        %p284 = pneg %p147
      $region30: #{bottleneck_forward.1} parent=11 // pred_check_branch
        %286 = sbr.rel (%p284) target = $region32
      $region31: #{bottleneck_forward.1} parent=11 // pred_region
        _
      $region32: #{bottleneck_forward.1} parent=11 // pred_fallthru
        _
      // Predicated region
      $region33: #{bottleneck_forward.1} parent=11 // pred_check
        %p287 = pneg %p168
      $region34: #{bottleneck_forward.1} parent=11 // pred_check_branch
        %289 = sbr.rel (%p287) target = $region36
      $region35: #{bottleneck_forward.1} parent=11 // pred_region
        _
      $region36: #{bottleneck_forward.1} parent=11 // pred_fallthru
        _
      // Predicated region
      $region37: #{bottleneck_forward.1} parent=11 // pred_check
        %p290 = pneg %p189
      $region38: #{bottleneck_forward.1} parent=11 // pred_check_branch
        %292 = sbr.rel (%p290) target = $region40
      $region39: #{bottleneck_forward.1} parent=11 // pred_region
        _
      $region40: #{bottleneck_forward.1} parent=11 // pred_fallthru
        _
      // Predicated region
      $region41: #{bottleneck_forward.1} parent=11 // pred_check
        %p293 = pneg %p210
      $region42: #{bottleneck_forward.1} parent=11 // pred_check_branch
        %295 = sbr.rel (%p293) target = $region44
      $region43: #{bottleneck_forward.1} parent=11 // pred_region
        _
      $region44: #{bottleneck_forward.1} parent=11 // pred_fallthru
        _
      // Predicated region
      $region45: #{bottleneck_forward.1} parent=11 // pred_check
        %p296 = pneg %p231
      $region46: #{bottleneck_forward.1} parent=11 // pred_check_branch
        %298 = sbr.rel (%p296) target = $region48
      $region47: #{bottleneck_forward.1} parent=11 // pred_region
        _
      $region48: #{bottleneck_forward.1} parent=11 // pred_fallthru
        _
    $region12: #{bottleneck_forward.1} parent=5 // pred_fallthru
      _
    %p299 = scmp.lt.s32.totalorder %s16, 2
    // Predicated region
    $region49: #{bottleneck_forward.1} parent=5 // pred_check
      %p300 = pneg %p299
    $region50: #{bottleneck_forward.1} parent=5 // pred_check_branch
      %302 = sbr.rel (%p300) target = $region52
    $region51: #{bottleneck_forward.1} parent=5 // pred_region
      // Predicated region
      $region53: #{bottleneck_forward.1} parent=51 // pred_check
        %p303 = pneg %p36
      $region54: #{bottleneck_forward.1} parent=51 // pred_check_branch
        %305 = sbr.rel (%p303) target = $region56
      $region55: #{bottleneck_forward.1} parent=51 // pred_region
        %p306 = scmp.lt.s32.totalorder %s16, 1
        %s307 = scalar_select %p306, %s16, 1
        %s308 = smul.addr %s307, 8
        %s309 = smul.addr %s308, 8
        %s310 = scalar_lea.vmem %s0, %s309
      $region56: #{bottleneck_forward.1} parent=51 // pred_fallthru
        _
    $region52: #{bottleneck_forward.1} parent=5 // pred_fallthru
      _
    %p311 = scmp.le.s32.totalorder 1, %s16
    %p312 = scmp.lt.s32.totalorder %s16, 3
    %p313 = pnand %p311, %p312
    %p314 = pneg %p313
    // Predicated region
    $region57: #{bottleneck_forward.1} parent=5 // pred_check
      _
    $region58: #{bottleneck_forward.1} parent=5 // pred_check_branch
      %316 = sbr.rel (%p313) target = $region60
    $region59: #{bottleneck_forward.1} parent=5 // pred_region
      %s317 = ssub.s32 %s16, 1
      %p318 = scmp.lt.s32.totalorder %s21, 1
      %s319 = scalar_select %p318, %s21, 1
      %s320 = smul.addr %s319, 8
      %s321 = smul.addr %s320, 8
      %s322 = scalar_lea.vmem %s0, %s321
      %p323 = pneg %p42
      %p324 = pneg %p39
      %p325 = pneg %p63
      %p326 = pneg %p60
      %p327 = pneg %p84
      %p328 = pneg %p81
      %p329 = pneg %p105
      %p330 = pneg %p102
      %p331 = pneg %p126
      %p332 = pneg %p123
      %p333 = pneg %p147
      %p334 = pneg %p144
      %p335 = pneg %p168
      %p336 = pneg %p165
      %p337 = pneg %p189
      %p338 = pneg %p186
      %p339 = pneg %p210
      %p340 = pneg %p207
      %p341 = pneg %p231
      %p342 = pneg %p228
      %p343 = pneg %p257
      %p344 = pneg %p254
      %p345 = scmp.lt.s32.totalorder %s21, 1
      %s346 = scalar_select %p345, %s21, 1
      %s347 = smul.addr %s346, 8
      %s348 = smul.addr %s347, 8
      %s349 = scalar_lea.vmem %s10, %s348
      %p350 = scmp.lt.s32.totalorder %s21, 1
      %s351 = scalar_select %p350, %s21, 1
      %s352 = smul.addr %s351, 8
      %s353 = smul.addr %s352, 8
      %s354 = scalar_lea.vmem %s0, %s353
      %p355 = scmp.lt.s32.totalorder %s21, 1
      %s356 = scalar_select %p355, %s21, 1
      %s357 = smul.addr %s356, 8
      %s358 = smul.addr %s357, 8
      %s359 = scalar_lea.vmem %s10, %s358
      %v361 = vld [vmem:[%s354] sm:$0xff]
      %v362 = vld [vmem:[%s354 + $0x8] sm:$0xff]
      %v363 = vld [vmem:[%s354 + $0x10] sm:$0xff]
      %v364 = vld [vmem:[%s354 + $0x18] sm:$0xff]
      %v365 = vld [vmem:[%s354 + $0x20] sm:$0xff]
      %v366 = vld [vmem:[%s354 + $0x28] sm:$0xff]
      %v367 = vld [vmem:[%s354 + $0x30] sm:$0xff]
      %v368 = vld [vmem:[%s354 + $0x38] sm:$0xff]
      %v369 = vld [vmem:[%s1] sm:$0xf]
      %v370 = vpack.c.bf16 %v363, %v361
      %v371 = vpack.c.bf16 %v364, %v362
      %v372 = vpack.c.bf16 %v367, %v365
      %v373 = vpack.c.bf16 %v368, %v366
      %vm374 = vcmask 261120
      %v376 = vsel %vm374, %v369, 0
      %378 = vmatprep.subr.bf16.mxu0 %v371
      %379 = vmatpush1.bf16.msra.mxu0 %v370
      %380 = vmatprep.subr.bf16.mxu0 %v373
      %381 = vmatpush1.bf16.msra.mxu0 %v372
      %382 = vmatprep.subr.bf16.mxu0 0
      %383 = vmatpush1.bf16.msra.mxu0 0
      %384 = vmatprep.subr.bf16.mxu0 0
      %385 = vmatpush1.bf16.msra.mxu0 0
      %386 = vmatprep.subr.bf16.mxu0 0
      %387 = vmatpush1.bf16.msra.mxu0 0
      %388 = vmatprep.subr.bf16.mxu0 0
      %389 = vmatpush1.bf16.msra.mxu0 0
      %390 = vmatprep.subr.bf16.mxu0 0
      %391 = vmatpush1.bf16.msra.mxu0 0
      %392 = vmatprep.subr.bf16.mxu0 0
      %393 = vmatpush1.bf16.msra.mxu0 0
      %394 = vmatprep.subr.bf16.mxu0 0
      %395 = vmatpush1.bf16.msra.mxu0 0
      %396 = vmatprep.subr.bf16.mxu0 0
      %397 = vmatpush1.bf16.msra.mxu0 0
      %398 = vmatprep.subr.bf16.mxu0 0
      %399 = vmatpush1.bf16.msra.mxu0 0
      %400 = vmatprep.subr.bf16.mxu0 0
      %401 = vmatpush1.bf16.msra.mxu0 0
      %402 = vmatprep.subr.bf16.mxu0 0
      %403 = vmatpush1.bf16.msra.mxu0 0
      %404 = vmatprep.subr.bf16.mxu0 0
      %405 = vmatpush1.bf16.msra.mxu0 0
      %406 = vmatprep.subr.bf16.mxu0 0
      %407 = vmatpush1.bf16.msra.mxu0 0
      %408 = vmatprep.subr.bf16.mxu0 0
      %409 = vmatpush1.bf16.msra.mxu0 0
      %410 = vmatprep.mubr.bf16.mxu0 0
      %411 = vmatmul.mubr.bf16.gmra.mrb[0].mxu0 %v376
      %v412 = vpop.f32.mrb[0].mxu0
      %v413 = vadd.f32 0.0, %v412
      %v414 = vpop.f32.mrb[0].mxu0
      %v415 = vadd.f32 0.0, %v414
      %v416 = vpop.f32.mrb[0].mxu0
      %v417 = vpop.f32.mrb[0].mxu0
      %418 = vdwg.mxu0
      %v419 = vld [vmem:[%s4] sm:$0xff]
      %421 = vset.pattern.permute.xlu0 0
      %422 = vperm.xlu0 %421, %v419
      %v423 = vpop.permute.xlu0 %422
      %v425 = vmul.f32 %v413, %v423
      %v426 = vmul.f32 %v415, %v423
      %v427 = vld [vmem:[%s5] sm:$0xff]
      %429 = vset.pattern.permute.xlu0 0
      %430 = vperm.xlu0 %429, %v427
      %v431 = vpop.permute.xlu0 %430
      %v433 = vadd.f32 %v425, %v431
      %v434 = vadd.f32 %v426, %v431
      %v435 = vmax.f32 %v433, 0.0
      %v436 = vmax.f32 %v434, 0.0
      %439 = vrot.lane.b32.xlu0 %v435, 17
      %v440 = vpop.permute.xlu0 %439
      %441 = vrot.lane.b32.xlu0 %v436, 17
      %v442 = vpop.permute.xlu0 %441
      %vm443 = vcmask 138240
      %v444 = vsel %vm443, %v440, %v442
      %v448 = vsel %vm443, 0.0, %v440
      %v449 = vsel %vm443, %v442, 0.0
      %v450 = vlaneseq
      %v451 = vand.u32 %v450, 127
      %v452 = vadd.s32 %v451, 128
      %v453 = vand.u32 %v451, 15
      %v454 = vand.u32 %v452, 15
      %vm455 = vcmp.ge.s32.totalorder %v453, 1
      %vm456 = vcmp.ge.s32.totalorder %v454, 1
      %vm457 = vcmp.le.s32.totalorder %v453, 14
      %vm458 = vcmp.le.s32.totalorder %v454, 14
      %v459 = vsel %vm455, %v448, 0.0
      %v460 = vsel %vm456, %v444, 0.0
      %463 = vrot.lane.b32.xlu0 %v448, 126
      %v464 = vpop.permute.xlu0 %463
      %465 = vrot.lane.b32.xlu0 %v444, 126
      %v466 = vpop.permute.xlu0 %465
      %467 = vrot.lane.b32.xlu0 %v449, 126
      %v468 = vpop.permute.xlu0 %467
      %vm469 = vcmask 1031168
      %v470 = vsel %vm469, %v464, %v466
      %v471 = vsel %vm469, %v466, %v468
      %v474 = vsel %vm457, %v470, 0.0
      %v475 = vsel %vm458, %v471, 0.0
      %476 = vrot.lane.b32.xlu0 %v448, 112
      %v477 = vpop.permute.xlu0 %476
      %478 = vrot.lane.b32.xlu0 %v444, 112
      %v479 = vpop.permute.xlu0 %478
      %480 = vrot.lane.b32.xlu0 %v449, 112
      %v481 = vpop.permute.xlu0 %480
      %vm482 = vcmask 916480
      %v483 = vsel %vm482, %v477, %v479
      %v484 = vsel %vm482, %v479, %v481
      %v487 = vsel %vm455, %v483, 0.0
      %v488 = vsel %vm456, %v484, 0.0
      %489 = vrot.lane.b32.xlu0 %v448, 110
      %v490 = vpop.permute.xlu0 %489
      %491 = vrot.lane.b32.xlu0 %v444, 110
      %v492 = vpop.permute.xlu0 %491
      %493 = vrot.lane.b32.xlu0 %v449, 110
      %v494 = vpop.permute.xlu0 %493
      %vm495 = vcmask 900096
      %v496 = vsel %vm495, %v490, %v492
      %v497 = vsel %vm495, %v492, %v494
      %v500 = vsel %vm457, %v496, 0.0
      %v501 = vsel %vm458, %v497, 0.0
      %502 = vrot.lane.b32.xlu0 %v448, 96
      %v503 = vpop.permute.xlu0 %502
      %504 = vrot.lane.b32.xlu0 %v444, 96
      %v505 = vpop.permute.xlu0 %504
      %506 = vrot.lane.b32.xlu0 %v449, 96
      %v507 = vpop.permute.xlu0 %506
      %vm508 = vcmask 785408
      %v509 = vsel %vm508, %v503, %v505
      %v510 = vsel %vm508, %v505, %v507
      %v513 = vsel %vm455, %v509, 0.0
      %v514 = vsel %vm456, %v510, 0.0
      %515 = vrot.lane.b32.xlu0 %v448, 94
      %v516 = vpop.permute.xlu0 %515
      %517 = vrot.lane.b32.xlu0 %v444, 94
      %v518 = vpop.permute.xlu0 %517
      %519 = vrot.lane.b32.xlu0 %v449, 94
      %v520 = vpop.permute.xlu0 %519
      %vm521 = vcmask 769024
      %v522 = vsel %vm521, %v516, %v518
      %v523 = vsel %vm521, %v518, %v520
      %v526 = vsel %vm457, %v522, 0.0
      %v527 = vsel %vm458, %v523, 0.0
      %528 = vrot.lane.b32.xlu0 %v448, 127
      %v529 = vpop.permute.xlu0 %528
      %530 = vrot.lane.b32.xlu0 %v444, 127
      %v531 = vpop.permute.xlu0 %530
      %532 = vrot.lane.b32.xlu0 %v449, 127
      %v533 = vpop.permute.xlu0 %532
      %vm534 = vcmask 1039360
      %v535 = vsel %vm534, %v529, %v531
      %v536 = vsel %vm534, %v531, %v533
      %539 = vrot.lane.b32.xlu0 %v448, 111
      %v540 = vpop.permute.xlu0 %539
      %541 = vrot.lane.b32.xlu0 %v444, 111
      %v542 = vpop.permute.xlu0 %541
      %543 = vrot.lane.b32.xlu0 %v449, 111
      %v544 = vpop.permute.xlu0 %543
      %vm545 = vcmask 908288
      %v546 = vsel %vm545, %v540, %v542
      %v547 = vsel %vm545, %v542, %v544
      %550 = vrot.lane.b32.xlu0 %v448, 95
      %v551 = vpop.permute.xlu0 %550
      %552 = vrot.lane.b32.xlu0 %v444, 95
      %v553 = vpop.permute.xlu0 %552
      %554 = vrot.lane.b32.xlu0 %v449, 95
      %v555 = vpop.permute.xlu0 %554
      %vm556 = vcmask 777216
      %v557 = vsel %vm556, %v551, %v553
      %v558 = vsel %vm556, %v553, %v555
      %v561 = vpack.c.bf16 %v535, %v459
      %v562 = vpack.c.bf16 %v536, %v460
      %v563 = vpack.c.bf16 %v487, %v474
      %v564 = vpack.c.bf16 %v488, %v475
      %v565 = vpack.c.bf16 %v500, %v546
      %v566 = vpack.c.bf16 %v501, %v547
      %v567 = vpack.c.bf16 %v557, %v513
      %v568 = vpack.c.bf16 %v558, %v514
      %v569 = vpack.c.bf16 %v526, %v526
      %v570 = vpack.c.bf16 %v527, %v527
      %v571 = vld [vmem:[%s2] sm:$0xf]
      %vm572 = vcmask 588800
      %v574 = vsel %vm572, %v571, 0
      %vm576 = vcmask 1043456
      %v578 = vsel %vm576, %v569, 0
      %v581 = vsel %vm576, %v570, 0
      %583 = vmatprep.subr.bf16.mxu0 %v562
      %584 = vmatpush1.bf16.msra.mxu0 %v561
      %585 = vmatprep.subr.bf16.mxu0 %v564
      %586 = vmatpush1.bf16.msra.mxu0 %v563
      %587 = vmatprep.subr.bf16.mxu0 %v566
      %588 = vmatpush1.bf16.msra.mxu0 %v565
      %589 = vmatprep.subr.bf16.mxu0 %v568
      %590 = vmatpush1.bf16.msra.mxu0 %v567
      %591 = vmatprep.subr.bf16.mxu0 %v581
      %592 = vmatpush1.bf16.msra.mxu0 %v578
      %593 = vmatprep.subr.bf16.mxu0 0
      %594 = vmatpush1.bf16.msra.mxu0 0
      %595 = vmatprep.subr.bf16.mxu0 0
      %596 = vmatpush1.bf16.msra.mxu0 0
      %597 = vmatprep.subr.bf16.mxu0 0
      %598 = vmatpush1.bf16.msra.mxu0 0
      %599 = vmatprep.subr.bf16.mxu0 0
      %600 = vmatpush1.bf16.msra.mxu0 0
      %601 = vmatprep.subr.bf16.mxu0 0
      %602 = vmatpush1.bf16.msra.mxu0 0
      %603 = vmatprep.subr.bf16.mxu0 0
      %604 = vmatpush1.bf16.msra.mxu0 0
      %605 = vmatprep.subr.bf16.mxu0 0
      %606 = vmatpush1.bf16.msra.mxu0 0
      %607 = vmatprep.subr.bf16.mxu0 0
      %608 = vmatpush1.bf16.msra.mxu0 0
      %609 = vmatprep.subr.bf16.mxu0 0
      %610 = vmatpush1.bf16.msra.mxu0 0
      %611 = vmatprep.subr.bf16.mxu0 0
      %612 = vmatpush1.bf16.msra.mxu0 0
      %613 = vmatprep.subr.bf16.mxu0 0
      %614 = vmatpush1.bf16.msra.mxu0 0
      %615 = vmatprep.mubr.bf16.mxu0 0
      %616 = vmatmul.mubr.bf16.gmra.mrb[0].mxu0 %v574
      %v617 = vpop.f32.mrb[0].mxu0
      %v618 = vadd.f32 0.0, %v617
      %v619 = vpop.f32.mrb[0].mxu0
      %v620 = vadd.f32 0.0, %v619
      %v621 = vpop.f32.mrb[0].mxu0
      %v622 = vpop.f32.mrb[0].mxu0
      %623 = vdwg.mxu0
      %v624 = vld [vmem:[%s6] sm:$0xff]
      %626 = vset.pattern.permute.xlu0 0
      %627 = vperm.xlu0 %626, %v624
      %v628 = vpop.permute.xlu0 %627
      %v630 = vmul.f32 %v618, %v628
      %v631 = vmul.f32 %v620, %v628
      %v632 = vld [vmem:[%s7] sm:$0xff]
      %634 = vset.pattern.permute.xlu0 0
      %635 = vperm.xlu0 %634, %v632
      %v636 = vpop.permute.xlu0 %635
      %v638 = vadd.f32 %v630, %v636
      %v639 = vadd.f32 %v631, %v636
      %v640 = vmax.f32 %v638, 0.0
      %v641 = vmax.f32 %v639, 0.0
      %v642 = vld [vmem:[%s3] sm:$0xf]
      %v643 = vld [vmem:[%s3 + $0x4] sm:$0xf]
      %v644 = vld [vmem:[%s3 + $0x8] sm:$0xf]
      %v645 = vld [vmem:[%s3 + $0xc] sm:$0xf]
      %v646 = vpack.c.bf16 %v640, %v640
      %v647 = vpack.c.bf16 %v641, %v641
      %v652 = vunpack.c.l.b16 %v642
      %v653 = vunpack.c.l.b16 %v643
      %v654 = vunpack.c.l.b16 %v644
      %v655 = vunpack.c.l.b16 %v645
      %v656 = vpack.c.b16 %v653, %v652
      %v657 = vpack.c.b16 %v655, %v654
      %vm658 = vcmask 64512
      %v660 = vsel %vm658, %v656, 0
      %v663 = vsel %vm658, %v657, 0
      %v666 = vsel %vm576, %v646, 0
      %v669 = vsel %vm576, %v647, 0
      %671 = vmatprep.subr.bf16.mxu0 %v669
      %672 = vmatpush1.bf16.msra.mxu0 %v666
      %673 = vmatprep.subr.bf16.mxu0 0
      %674 = vmatpush1.bf16.msra.mxu0 0
      %675 = vmatprep.subr.bf16.mxu0 0
      %676 = vmatpush1.bf16.msra.mxu0 0
      %677 = vmatprep.subr.bf16.mxu0 0
      %678 = vmatpush1.bf16.msra.mxu0 0
      %679 = vmatprep.subr.bf16.mxu0 0
      %680 = vmatpush1.bf16.msra.mxu0 0
      %681 = vmatprep.subr.bf16.mxu0 0
      %682 = vmatpush1.bf16.msra.mxu0 0
      %683 = vmatprep.subr.bf16.mxu0 0
      %684 = vmatpush1.bf16.msra.mxu0 0
      %685 = vmatprep.subr.bf16.mxu0 0
      %686 = vmatpush1.bf16.msra.mxu0 0
      %687 = vmatprep.subr.bf16.mxu0 0
      %688 = vmatpush1.bf16.msra.mxu0 0
      %689 = vmatprep.subr.bf16.mxu0 0
      %690 = vmatpush1.bf16.msra.mxu0 0
      %691 = vmatprep.subr.bf16.mxu0 0
      %692 = vmatpush1.bf16.msra.mxu0 0
      %693 = vmatprep.subr.bf16.mxu0 0
      %694 = vmatpush1.bf16.msra.mxu0 0
      %695 = vmatprep.subr.bf16.mxu0 0
      %696 = vmatpush1.bf16.msra.mxu0 0
      %697 = vmatprep.subr.bf16.mxu0 0
      %698 = vmatpush1.bf16.msra.mxu0 0
      %699 = vmatprep.subr.bf16.mxu0 0
      %700 = vmatpush1.bf16.msra.mxu0 0
      %701 = vmatprep.subr.bf16.mxu0 0
      %702 = vmatpush1.bf16.msra.mxu0 0
      %703 = vmatprep.mubr.bf16.mxu0 0
      %704 = vmatmul.mubr.bf16.gmra.mrb[0].mxu0 %v660
      %v705 = vpop.f32.mrb[0].mxu0
      %v706 = vadd.f32 0.0, %v705
      %v707 = vpop.f32.mrb[0].mxu0
      %v708 = vadd.f32 0.0, %v707
      %v709 = vpop.f32.mrb[0].mxu0
      %v710 = vadd.f32 0.0, %v709
      %v711 = vpop.f32.mrb[0].mxu0
      %v712 = vadd.f32 0.0, %v711
      %713 = vmatprep.mubr.bf16.mxu0 0
      %714 = vmatmul.mubr.bf16.gmra.mrb[0].mxu0 %v663
      %v715 = vpop.f32.mrb[0].mxu0
      %v716 = vadd.f32 0.0, %v715
      %v717 = vpop.f32.mrb[0].mxu0
      %v718 = vadd.f32 0.0, %v717
      %v719 = vpop.f32.mrb[0].mxu0
      %v720 = vadd.f32 0.0, %v719
      %v721 = vpop.f32.mrb[0].mxu0
      %v722 = vadd.f32 0.0, %v721
      %723 = vdwg.mxu0
      %v724 = vld [vmem:[%s8] sm:$0xff]
      %v725 = vld [vmem:[%s8 + $0x8] sm:$0xff]
      %v726 = vld [vmem:[%s8 + $0x10] sm:$0xff]
      %v727 = vld [vmem:[%s8 + $0x18] sm:$0xff]
      %729 = vset.pattern.permute.xlu0 0
      %730 = vperm.xlu0 %729, %v724
      %v731 = vpop.permute.xlu0 %730
      %734 = vset.pattern.permute.xlu0 0
      %735 = vperm.xlu0 %734, %v725
      %v736 = vpop.permute.xlu0 %735
      %739 = vset.pattern.permute.xlu0 0
      %740 = vperm.xlu0 %739, %v726
      %v741 = vpop.permute.xlu0 %740
      %744 = vset.pattern.permute.xlu0 0
      %745 = vperm.xlu0 %744, %v727
      %v746 = vpop.permute.xlu0 %745
      %v748 = vmul.f32 %v706, %v731
      %v749 = vmul.f32 %v708, %v731
      %v750 = vmul.f32 %v710, %v736
      %v751 = vmul.f32 %v712, %v736
      %v752 = vmul.f32 %v716, %v741
      %v753 = vmul.f32 %v718, %v741
      %v754 = vmul.f32 %v720, %v746
      %v755 = vmul.f32 %v722, %v746
      %v756 = vld [vmem:[%s9] sm:$0xff]
      %v757 = vld [vmem:[%s9 + $0x8] sm:$0xff]
      %v758 = vld [vmem:[%s9 + $0x10] sm:$0xff]
      %v759 = vld [vmem:[%s9 + $0x18] sm:$0xff]
      %761 = vset.pattern.permute.xlu0 0
      %762 = vperm.xlu0 %761, %v756
      %v763 = vpop.permute.xlu0 %762
      %766 = vset.pattern.permute.xlu0 0
      %767 = vperm.xlu0 %766, %v757
      %v768 = vpop.permute.xlu0 %767
      %771 = vset.pattern.permute.xlu0 0
      %772 = vperm.xlu0 %771, %v758
      %v773 = vpop.permute.xlu0 %772
      %776 = vset.pattern.permute.xlu0 0
      %777 = vperm.xlu0 %776, %v759
      %v778 = vpop.permute.xlu0 %777
      %v780 = vadd.f32 %v748, %v763
      %v781 = vadd.f32 %v749, %v763
      %v782 = vadd.f32 %v750, %v768
      %v783 = vadd.f32 %v751, %v768
      %v784 = vadd.f32 %v752, %v773
      %v785 = vadd.f32 %v753, %v773
      %v786 = vadd.f32 %v754, %v778
      %v787 = vadd.f32 %v755, %v778
      %v788 = vadd.f32 %v780, %v361
      %v789 = vadd.f32 %v781, %v362
      %v790 = vadd.f32 %v782, %v363
      %v791 = vadd.f32 %v783, %v364
      %v792 = vadd.f32 %v784, %v365
      %v793 = vadd.f32 %v785, %v366
      %v794 = vadd.f32 %v786, %v367
      %v795 = vadd.f32 %v787, %v368
      %v796 = vmax.f32 %v788, 0.0
      %v797 = vmax.f32 %v789, 0.0
      %v798 = vmax.f32 %v790, 0.0
      %v799 = vmax.f32 %v791, 0.0
      %v800 = vmax.f32 %v792, 0.0
      %v801 = vmax.f32 %v793, 0.0
      %v802 = vmax.f32 %v794, 0.0
      %v803 = vmax.f32 %v795, 0.0
      %804 = vst [vmem:[%s359] sm:$0xff] %v796
      %805 = vst [vmem:[%s359 + $0x8] sm:$0xff] %v797
      %806 = vst [vmem:[%s359 + $0x10] sm:$0xff] %v798
      %807 = vst [vmem:[%s359 + $0x18] sm:$0xff] %v799
      %808 = vst [vmem:[%s359 + $0x20] sm:$0xff] %v800
      %809 = vst [vmem:[%s359 + $0x28] sm:$0xff] %v801
      %810 = vst [vmem:[%s359 + $0x30] sm:$0xff] %v802
      %811 = vst [vmem:[%s359 + $0x38] sm:$0xff] %v803
      %p812 = scmp.lt.s32.totalorder %s21, 1
      %s813 = scalar_select %p812, %s21, 1
      %s814 = smul.addr %s813, 8
      %s815 = smul.addr %s814, 8
      %s816 = scalar_lea.vmem %s10, %s815
      // Predicated region
      $region61: #{bottleneck_forward.1} parent=59 // pred_check
        %p817 = pneg %p254
      $region62: #{bottleneck_forward.1} parent=59 // pred_check_branch
        %819 = sbr.rel (%p817) target = $region64
      $region63: #{bottleneck_forward.1} parent=59 // pred_region
        _
      $region64: #{bottleneck_forward.1} parent=59 // pred_fallthru
        _
    $region60: #{bottleneck_forward.1} parent=5 // pred_fallthru
      _
    %p820 = scmp.le.s32.totalorder 2, %s16
    // Predicated region
    $region65: #{bottleneck_forward.1} parent=5 // pred_check
      %p821 = pneg %p820
    $region66: #{bottleneck_forward.1} parent=5 // pred_check_branch
      %823 = sbr.rel (%p821) target = $region68
    $region67: #{bottleneck_forward.1} parent=5 // pred_region
      %s824 = ssub.s32 %s16, 2
      // Predicated region
      $region69: #{bottleneck_forward.1} parent=67 // pred_check
        %p825 = pneg %p260
      $region70: #{bottleneck_forward.1} parent=67 // pred_check_branch
        %827 = sbr.rel (%p825) target = $region72
      $region71: #{bottleneck_forward.1} parent=67 // pred_region
        %p828 = scmp.lt.s32.totalorder %s22, 1
        %s829 = scalar_select %p828, %s22, 1
        %s830 = smul.addr %s829, 8
        %s831 = smul.addr %s830, 8
        %s832 = scalar_lea.vmem %s10, %s831
      $region72: #{bottleneck_forward.1} parent=67 // pred_fallthru
        _
    $region68: #{bottleneck_forward.1} parent=5 // pred_fallthru
      _
  $region6: #{bottleneck_forward.1} parent=0 // loop_footer
    %s20 = sadd.s32 1, %s16
  $region7: #{bottleneck_forward.1} parent=0 // loop_footer_branch
    %15 = sbr.rel target = $region3
  $region8: #{bottleneck_forward.1} parent=0 // loop_exit
    _

</llo_original>
